<compile_context>
chip_gen: v7x
topology: tpu7x:2x2x1
jax: 0.10.0
libtpu: 0.0.40
codegen_flags: <defaults>
</compile_context>

<pallas_src>
import jax
import jax.numpy as jnp
from jax.experimental import pallas as pl
from jax.experimental.pallas import tpu as pltpu
import numpy as np

HIDDEN = 8                      # hidden_channels of the adapter
MAX_TILE_ROWS = 2048            # 2048 x 512 x 4 B = 4 MiB per tile
MIN_GRID_BLOCKS = 4             # keep >= 4 parallel steps (v7x megacore + overlap)
VMEM_LIMIT_BYTES = 32 * 1024 * 1024


def _round_up(x, m):
    return ((x + m - 1) // m) * m


def _make_adapter_kernel(hidden, use_bf16):
    def kernel(params_ref, x_ref, o_ref):
        # params_ref: (3H+1,) f32 scalar-prefetch (SMEM) = [w1 | b1 | w2 | b2]
        # x_ref / o_ref: (tm, lanes) f32 VMEM tiles (lane-dense).
        x = x_ref[...]
        b2 = params_ref[3 * hidden]
        acc = jnp.full(x.shape, b2, jnp.float32)        # b2 folded into init
        if use_bf16:
            # Packed-bf16 VALU path (v6e/v7x): chain in bf16, accumulate in f32.
            xb = x.astype(jnp.bfloat16)
            for c in range(hidden):                     # unrolled VPU chain
                w1c = params_ref[c].astype(jnp.bfloat16)
                b1c = params_ref[hidden + c].astype(jnp.bfloat16)
                w2c = params_ref[2 * hidden + c].astype(jnp.bfloat16)
                h = jnp.maximum(w1c * xb + b1c, 0.0) * w2c
                acc = acc + h.astype(jnp.float32)
        else:
            for c in range(hidden):                     # unrolled VPU chain (f32)
                h = jnp.maximum(params_ref[c] * x + params_ref[hidden + c], 0.0)
                acc = acc + params_ref[2 * hidden + c] * h
        o_ref[...] = acc
    return kernel


def graph_bias_adapter_conv(g_matrix, w1, b1, w2, b2, *,
                            max_tile_rows=MAX_TILE_ROWS,
                            min_grid_blocks=MIN_GRID_BLOCKS,
                            use_bf16_compute=False):
    """g_matrix: (B, N, N) or (B, 1, N, N) float32. Returns (B, N, N)."""
    if g_matrix.ndim == 4:
        assert g_matrix.shape[1] == 1
        g_matrix = g_matrix[:, 0]
    B, N, M = g_matrix.shape
    assert N == M
    g_matrix = g_matrix.astype(jnp.float32)

    hidden = int(w1.shape[0])
    total = B * N * M

    # Lane-dense 2-D view (rows, lanes): pick a lane count that divides the
    # element count so no wrapper-side pad / unpad copies are needed.
    lanes = next((c for c in (512, 256, 128) if total % c == 0), 512)
    rows = pl.cdiv(total, lanes)
    padded_total = rows * lanes
    needs_pad = padded_total != total

    flat = g_matrix.reshape(-1)
    if needs_pad:                      # rare fallback (no lane count divides total)
        flat = jnp.pad(flat, (0, padded_total - total))
    x2d = flat.reshape(rows, lanes)

    # Tile rows: multiple of 8 (or the full row extent for tiny inputs), capped
    # at ~4 MiB, and small enough that the parallel grid has >= min_grid_blocks
    # steps.  The last row-block may be ragged; Pallas masks its writes.
    if rows < 8:
        tm = rows
    else:
        target = _round_up(pl.cdiv(rows, min_grid_blocks), 8)
        tm = max(8, min(max_tile_rows, target))
    grid = (pl.cdiv(rows, tm),)

    # Pack all (tiny) weights into one scalar-prefetch array: [w1 | b1 | w2 | b2]
    params = jnp.concatenate(
        [w1.reshape(-1), b1.reshape(-1), w2.reshape(-1), b2.reshape(-1)]
    ).astype(jnp.float32)

    cost = pl.CostEstimate(
        flops=5 * hidden * rows * lanes,      # mul+add+max+mul+add per chan/elem
        transcendentals=0,
        bytes_accessed=2 * 4 * rows * lanes,  # what the kernel actually moves
    )

    out2d = pl.pallas_call(
        _make_adapter_kernel(hidden, use_bf16_compute),
        out_shape=jax.ShapeDtypeStruct((rows, lanes), jnp.float32),
        grid_spec=pltpu.PrefetchScalarGridSpec(
            num_scalar_prefetch=1,            # packed weights -> SMEM, loaded once
            grid=grid,
            in_specs=[pl.BlockSpec((tm, lanes), lambda i, p: (i, 0))],
            out_specs=pl.BlockSpec((tm, lanes), lambda i, p: (i, 0)),
        ),
        compiler_params=pltpu.CompilerParams(
            dimension_semantics=("parallel",),
            vmem_limit_bytes=VMEM_LIMIT_BYTES,
        ),
        cost_estimate=cost,
    )(params, x2d)

    out_flat = out2d.reshape(-1)
    if needs_pad:
        out_flat = out_flat[:total]
    return out_flat.reshape(B, N, M)


def _xavier_uniform(key, shape, fan_in, fan_out):
    bound = np.sqrt(6.0 / (fan_in + fan_out))
    return jax.random.uniform(key, shape, jnp.float32, -bound, bound)


def init_params(key, hidden_channels=HIDDEN):
    k1, k2 = jax.random.split(key)
    # conv1: Conv2d(1, H, 1) -> weight (H, 1, 1, 1); fan_in=1, fan_out=H
    w1 = _xavier_uniform(k1, (hidden_channels,), 1, hidden_channels)
    b1 = jnp.zeros((hidden_channels,), jnp.float32)
    # conv2: Conv2d(H, 1, 1) -> weight (1, H, 1, 1); fan_in=H, fan_out=1
    w2 = _xavier_uniform(k2, (hidden_channels,), hidden_channels, 1)
    b2 = jnp.zeros((1,), jnp.float32)
    return w1, b1, w2, b2


def reference_jax(g_matrix, w1, b1, w2, b2):
    # Pure-JAX reference of the 1x1-conv adapter.
    if g_matrix.ndim == 4:
        g_matrix = g_matrix[:, 0]
    x = g_matrix[..., None]                              # (B, N, N, 1)
    h = jnp.maximum(x * w1 + b1, 0.0)                    # (B, N, N, H)
    return jnp.sum(h * w2, axis=-1) + b2[0]              # (B, N, N)


if __name__ == "__main__":
    key = jax.random.PRNGKey(0)
    k_param, k_b1, k_b2, k_d1, k_d2, k_d3 = jax.random.split(key, 6)

    w1, b1, w2, b2 = init_params(k_param, HIDDEN)
    # The module initializes biases to 0; perturb them so the bias path of the
    # kernel is actually exercised by the correctness check.
    b1 = 0.1 * jax.random.normal(k_b1, b1.shape, jnp.float32)
    b2 = 0.1 * jax.random.normal(k_b2, b2.shape, jnp.float32)

    # Case 1: small N -- element count divides 512 exactly, zero-copy wrapper.
    B, N = 2, 16
    g = jax.random.normal(k_d1, (B, N, N), jnp.float32)
    out = jax.block_until_ready(graph_bias_adapter_conv(g, w1, b1, w2, b2))
    ref = reference_jax(g, w1, b1, w2, b2)
    np.testing.assert_allclose(np.asarray(out), np.asarray(ref), rtol=1e-5, atol=1e-5)

    # Case 2: ragged last row-block (rows=25, tm=8, grid=4) -- exercises
    # Pallas boundary write-masking with NO wrapper pad/slice.
    B2, N2 = 2, 80
    g2 = jax.random.normal(k_d2, (B2, N2, N2), jnp.float32)
    out2 = jax.block_until_ready(graph_bias_adapter_conv(g2, w1, b1, w2, b2))
    ref2 = reference_jax(g2, w1, b1, w2, b2)
    np.testing.assert_allclose(np.asarray(out2), np.asarray(ref2), rtol=1e-5, atol=1e-5)

    # Case 3: element count not divisible by any lane choice -> minimal pad path.
    B3, N3 = 1, 12
    g3 = jax.random.normal(k_d3, (B3, N3, N3), jnp.float32)
    out3 = jax.block_until_ready(graph_bias_adapter_conv(g3, w1, b1, w2, b2))
    ref3 = reference_jax(g3, w1, b1, w2, b2)
    np.testing.assert_allclose(np.asarray(out3), np.asarray(ref3), rtol=1e-5, atol=1e-5)

    # Case 4: opt-in packed-bf16 compute path (v6e/v7x VALU relief); looser tol
    # because the per-channel chain runs in bf16 (accumulation stays f32).
    out4 = jax.block_until_ready(
        graph_bias_adapter_conv(g, w1, b1, w2, b2, use_bf16_compute=True))
    np.testing.assert_allclose(np.asarray(out4), np.asarray(ref), rtol=3e-2, atol=3e-2)

    print("KERNEL_OK")
</pallas_src>

<mosaic_0001>
module attributes {stable_mosaic.version = 11 : i64} {
  func.func @kernel(%arg0: i32, %arg1: memref<25xf32, #tpu.memory_space<smem>>, %arg2: memref<1x512xf32, #tpu.memory_space<vmem>>, %arg3: memref<1x512xf32, #tpu.memory_space<vmem>>) attributes {dimension_semantics = [#tpu.dimension_semantics<parallel>], iteration_bounds = array<i64: 1>, scalar_prefetch = 1 : i64, scratch_operands = 0 : i64, tpu.core_type = #tpu.core_type<tc>, window_params = [{transform_indices = @transform_0, window_bounds = array<i64: 1, 512>}, {transform_indices = @transform_1, window_bounds = array<i64: 1, 512>}]} {
    %c0 = arith.constant 0 : index
    %c0_0 = arith.constant 0 : index
    %0 = vector.load %arg2[%c0, %c0_0] : memref<1x512xf32, #tpu.memory_space<vmem>>, vector<1x512xf32>
    %c24 = arith.constant 24 : index
    %1 = memref.load %arg1[%c24] : memref<25xf32, #tpu.memory_space<smem>>
    %2 = vector.broadcast %1 : f32 to vector<1x512xf32>
    %c0_1 = arith.constant 0 : index
    %3 = memref.load %arg1[%c0_1] : memref<25xf32, #tpu.memory_space<smem>>
    %4 = vector.broadcast %3 : f32 to vector<1x512xf32>
    %5 = arith.mulf %4, %0 : vector<1x512xf32>
    %c8 = arith.constant 8 : index
    %6 = memref.load %arg1[%c8] : memref<25xf32, #tpu.memory_space<smem>>
    %7 = vector.broadcast %6 : f32 to vector<1x512xf32>
    %8 = arith.addf %5, %7 : vector<1x512xf32>
    %cst = arith.constant 0.000000e+00 : f32
    %9 = vector.broadcast %cst : f32 to vector<1x512xf32>
    %10 = arith.maximumf %8, %9 : vector<1x512xf32>
    %c16 = arith.constant 16 : index
    %11 = memref.load %arg1[%c16] : memref<25xf32, #tpu.memory_space<smem>>
    %12 = vector.broadcast %11 : f32 to vector<1x512xf32>
    %13 = arith.mulf %12, %10 : vector<1x512xf32>
    %14 = arith.addf %2, %13 : vector<1x512xf32>
    %c1 = arith.constant 1 : index
    %15 = memref.load %arg1[%c1] : memref<25xf32, #tpu.memory_space<smem>>
    %16 = vector.broadcast %15 : f32 to vector<1x512xf32>
    %17 = arith.mulf %16, %0 : vector<1x512xf32>
    %c9 = arith.constant 9 : index
    %18 = memref.load %arg1[%c9] : memref<25xf32, #tpu.memory_space<smem>>
    %19 = vector.broadcast %18 : f32 to vector<1x512xf32>
    %20 = arith.addf %17, %19 : vector<1x512xf32>
    %cst_2 = arith.constant 0.000000e+00 : f32
    %21 = vector.broadcast %cst_2 : f32 to vector<1x512xf32>
    %22 = arith.maximumf %20, %21 : vector<1x512xf32>
    %c17 = arith.constant 17 : index
    %23 = memref.load %arg1[%c17] : memref<25xf32, #tpu.memory_space<smem>>
    %24 = vector.broadcast %23 : f32 to vector<1x512xf32>
    %25 = arith.mulf %24, %22 : vector<1x512xf32>
    %26 = arith.addf %14, %25 : vector<1x512xf32>
    %c2 = arith.constant 2 : index
    %27 = memref.load %arg1[%c2] : memref<25xf32, #tpu.memory_space<smem>>
    %28 = vector.broadcast %27 : f32 to vector<1x512xf32>
    %29 = arith.mulf %28, %0 : vector<1x512xf32>
    %c10 = arith.constant 10 : index
    %30 = memref.load %arg1[%c10] : memref<25xf32, #tpu.memory_space<smem>>
    %31 = vector.broadcast %30 : f32 to vector<1x512xf32>
    %32 = arith.addf %29, %31 : vector<1x512xf32>
    %cst_3 = arith.constant 0.000000e+00 : f32
    %33 = vector.broadcast %cst_3 : f32 to vector<1x512xf32>
    %34 = arith.maximumf %32, %33 : vector<1x512xf32>
    %c18 = arith.constant 18 : index
    %35 = memref.load %arg1[%c18] : memref<25xf32, #tpu.memory_space<smem>>
    %36 = vector.broadcast %35 : f32 to vector<1x512xf32>
    %37 = arith.mulf %36, %34 : vector<1x512xf32>
    %38 = arith.addf %26, %37 : vector<1x512xf32>
    %c3 = arith.constant 3 : index
    %39 = memref.load %arg1[%c3] : memref<25xf32, #tpu.memory_space<smem>>
    %40 = vector.broadcast %39 : f32 to vector<1x512xf32>
    %41 = arith.mulf %40, %0 : vector<1x512xf32>
    %c11 = arith.constant 11 : index
    %42 = memref.load %arg1[%c11] : memref<25xf32, #tpu.memory_space<smem>>
    %43 = vector.broadcast %42 : f32 to vector<1x512xf32>
    %44 = arith.addf %41, %43 : vector<1x512xf32>
    %cst_4 = arith.constant 0.000000e+00 : f32
    %45 = vector.broadcast %cst_4 : f32 to vector<1x512xf32>
    %46 = arith.maximumf %44, %45 : vector<1x512xf32>
    %c19 = arith.constant 19 : index
    %47 = memref.load %arg1[%c19] : memref<25xf32, #tpu.memory_space<smem>>
    %48 = vector.broadcast %47 : f32 to vector<1x512xf32>
    %49 = arith.mulf %48, %46 : vector<1x512xf32>
    %50 = arith.addf %38, %49 : vector<1x512xf32>
    %c4 = arith.constant 4 : index
    %51 = memref.load %arg1[%c4] : memref<25xf32, #tpu.memory_space<smem>>
    %52 = vector.broadcast %51 : f32 to vector<1x512xf32>
    %53 = arith.mulf %52, %0 : vector<1x512xf32>
    %c12 = arith.constant 12 : index
    %54 = memref.load %arg1[%c12] : memref<25xf32, #tpu.memory_space<smem>>
    %55 = vector.broadcast %54 : f32 to vector<1x512xf32>
    %56 = arith.addf %53, %55 : vector<1x512xf32>
    %cst_5 = arith.constant 0.000000e+00 : f32
    %57 = vector.broadcast %cst_5 : f32 to vector<1x512xf32>
    %58 = arith.maximumf %56, %57 : vector<1x512xf32>
    %c20 = arith.constant 20 : index
    %59 = memref.load %arg1[%c20] : memref<25xf32, #tpu.memory_space<smem>>
    %60 = vector.broadcast %59 : f32 to vector<1x512xf32>
    %61 = arith.mulf %60, %58 : vector<1x512xf32>
    %62 = arith.addf %50, %61 : vector<1x512xf32>
    %c5 = arith.constant 5 : index
    %63 = memref.load %arg1[%c5] : memref<25xf32, #tpu.memory_space<smem>>
    %64 = vector.broadcast %63 : f32 to vector<1x512xf32>
    %65 = arith.mulf %64, %0 : vector<1x512xf32>
    %c13 = arith.constant 13 : index
    %66 = memref.load %arg1[%c13] : memref<25xf32, #tpu.memory_space<smem>>
    %67 = vector.broadcast %66 : f32 to vector<1x512xf32>
    %68 = arith.addf %65, %67 : vector<1x512xf32>
    %cst_6 = arith.constant 0.000000e+00 : f32
    %69 = vector.broadcast %cst_6 : f32 to vector<1x512xf32>
    %70 = arith.maximumf %68, %69 : vector<1x512xf32>
    %c21 = arith.constant 21 : index
    %71 = memref.load %arg1[%c21] : memref<25xf32, #tpu.memory_space<smem>>
    %72 = vector.broadcast %71 : f32 to vector<1x512xf32>
    %73 = arith.mulf %72, %70 : vector<1x512xf32>
    %74 = arith.addf %62, %73 : vector<1x512xf32>
    %c6 = arith.constant 6 : index
    %75 = memref.load %arg1[%c6] : memref<25xf32, #tpu.memory_space<smem>>
    %76 = vector.broadcast %75 : f32 to vector<1x512xf32>
    %77 = arith.mulf %76, %0 : vector<1x512xf32>
    %c14 = arith.constant 14 : index
    %78 = memref.load %arg1[%c14] : memref<25xf32, #tpu.memory_space<smem>>
    %79 = vector.broadcast %78 : f32 to vector<1x512xf32>
    %80 = arith.addf %77, %79 : vector<1x512xf32>
    %cst_7 = arith.constant 0.000000e+00 : f32
    %81 = vector.broadcast %cst_7 : f32 to vector<1x512xf32>
    %82 = arith.maximumf %80, %81 : vector<1x512xf32>
    %c22 = arith.constant 22 : index
    %83 = memref.load %arg1[%c22] : memref<25xf32, #tpu.memory_space<smem>>
    %84 = vector.broadcast %83 : f32 to vector<1x512xf32>
    %85 = arith.mulf %84, %82 : vector<1x512xf32>
    %86 = arith.addf %74, %85 : vector<1x512xf32>
    %c7 = arith.constant 7 : index
    %87 = memref.load %arg1[%c7] : memref<25xf32, #tpu.memory_space<smem>>
    %88 = vector.broadcast %87 : f32 to vector<1x512xf32>
    %89 = arith.mulf %88, %0 : vector<1x512xf32>
    %c15 = arith.constant 15 : index
    %90 = memref.load %arg1[%c15] : memref<25xf32, #tpu.memory_space<smem>>
    %91 = vector.broadcast %90 : f32 to vector<1x512xf32>
    %92 = arith.addf %89, %91 : vector<1x512xf32>
    %cst_8 = arith.constant 0.000000e+00 : f32
    %93 = vector.broadcast %cst_8 : f32 to vector<1x512xf32>
    %94 = arith.maximumf %92, %93 : vector<1x512xf32>
    %c23 = arith.constant 23 : index
    %95 = memref.load %arg1[%c23] : memref<25xf32, #tpu.memory_space<smem>>
    %96 = vector.broadcast %95 : f32 to vector<1x512xf32>
    %97 = arith.mulf %96, %94 : vector<1x512xf32>
    %98 = arith.addf %86, %97 : vector<1x512xf32>
    %c0_9 = arith.constant 0 : index
    %c0_10 = arith.constant 0 : index
    %99 = vector.load %arg3[%c0_9, %c0_10] : memref<1x512xf32, #tpu.memory_space<vmem>>, vector<1x512xf32>
    tpu.vector_store %arg3[%c0_9, %c0_10], %98 {strides = array<i32>} : memref<1x512xf32, #tpu.memory_space<vmem>>, vector<1x512xf32>,
    return
  }
  func.func @transform_0(%arg0: i32, %arg1: memref<25xf32, #tpu.memory_space<smem>>) -> (i32, i32) {
    %c0_i32 = arith.constant 0 : i32
    %c0_i32_0 = arith.constant 0 : i32
    return %arg0, %c0_i32 : i32, i32
  }
  func.func @transform_1(%arg0: i32, %arg1: memref<25xf32, #tpu.memory_space<smem>>) -> (i32, i32) {
    %c0_i32 = arith.constant 0 : i32
    %c0_i32_0 = arith.constant 0 : i32
    return %arg0, %c0_i32 : i32, i32
  }
}

</mosaic_0001>

<llo_original>
// kernel: tpu_custom_call.1
$region0: #{tpu_custom_call.1}
  #allocation0 [shape = 'u32[]', space=smem, size = 0x4, offset = 0x4, fixed_abs, tag = 'smem constant byte address 0x4 - core index']
  #allocation1 [shape = 'u32[144,128]{1,0:T(1,128)}', space=vmem, size = 0x12000, scoped, tag = 'internal scratch']
  #allocation2 [shape = 's32[1]{0}', space=sflag, size = 0x4, scoped, tag = 'scoped memory for tpu_custom_call.1']
  #allocation3 [shape = 'u8[512]{0}', space=smem, size = 0x200, scoped, tag = 'prefetched SMEM operand 0']
  %s0 = inlined_call_operand.hbm [shape: f32[25], index: 0, kind: input, shape index: {}]
  %s1 = inlined_call_operand.hbm [shape: f32[1,512], index: 1, kind: input, shape index: {}]
  %s2 = inlined_call_operand.hbm [shape: f32[1,512], index: 2, kind: output, shape index: {}]
  %s3 = sld [smem:[#allocation0]]
  $region18: #{tpu_custom_call.1} parent=0
    _
  %s5 = ssub.s32 1, %s3
  %s6 = scalar_select 0, %s5, %s3
  %8 = dma.hbm_to_smem %s0, 16, [#allocation3], [#allocation2]
  %9 = dma.done [#allocation2], 16
  %10 = sfence
  $region1: #{tpu_custom_call.1} parent=0
    #allocation4 [shape = 'u8[2048]{0}', space=vmem, size = 0x800, scoped, tag = 'input window, operand 1, single buffered']
    #allocation5 [shape = 's32[1]{0}', space=sflag, size = 0x4, scoped, tag = 'scoped memory for tpu_custom_call.1']
    #allocation6 [shape = 's32[1]{0}', space=sflag, size = 0x4, scoped, tag = 'scoped memory for tpu_custom_call.1']
    #allocation7 [shape = 'u8[2048]{0}', space=vmem, size = 0x800, scoped, tag = 'output window, operand 0, single buffered']
    %11 = vsyncpa [#allocation5], 0
    %12 = vsyncpa [#allocation6], 0
    // Predicated region
    $region2: #{tpu_custom_call.1} parent=1 // pred_check
      _
    $region3: #{tpu_custom_call.1} parent=1 // pred_check_branch
      %14 = sbr.rel (0) target = $region5
    $region4: #{tpu_custom_call.1} parent=1 // pred_region
      %s16 = ssub.s32 64, 64
      %17 = vsyncadd [#allocation5], %s16
      %s19 = sshll.u32 [#allocation4], 4
      %s20 = int_to_ptr.vmem [resolvable:$true] %s19
      %22 = dma.hbm_to_vmem [thread:$0]  %s1, 64, %s20, [#allocation5]
    $region5: #{tpu_custom_call.1} parent=1 // pred_fallthru
      _
    // Predicated region
    $region6: #{tpu_custom_call.1} parent=1 // pred_check
      _
    $region7: #{tpu_custom_call.1} parent=1 // pred_check_branch
      %24 = sbr.rel (0) target = $region9
    $region8: #{tpu_custom_call.1} parent=1 // pred_region
      %25 = dma.done [#allocation5], 64
    $region9: #{tpu_custom_call.1} parent=1 // pred_fallthru
      _
    %v26 = vld [vmem:[#allocation4] sm:$0xf]
    %s27 = sld [smem:[#allocation3 + $0x18]]
    %v28 = vstv %s27
    %s29 = sld [smem:[#allocation3]]
    %v30 = vstv %s29
    %v31 = vmul.f32 %v30, %v26
    %s32 = sld [smem:[#allocation3 + $0x8]]
    %v33 = vstv %s32
    %v34 = vadd.f32 %v31, %v33
    %v35 = vmax.f32 %v34, 0.0
    %s36 = sld [smem:[#allocation3 + $0x10]]
    %v37 = vstv %s36
    %v38 = vmul.f32 %v37, %v35
    %v39 = vadd.f32 %v28, %v38
    %s40 = sld [smem:[#allocation3 + $0x1]]
    %v41 = vstv %s40
    %v42 = vmul.f32 %v41, %v26
    %s43 = sld [smem:[#allocation3 + $0x9]]
    %v44 = vstv %s43
    %v45 = vadd.f32 %v42, %v44
    %v46 = vmax.f32 %v45, 0.0
    %s47 = sld [smem:[#allocation3 + $0x11]]
    %v48 = vstv %s47
    %v49 = vmul.f32 %v48, %v46
    %v50 = vadd.f32 %v39, %v49
    %s51 = sld [smem:[#allocation3 + $0x2]]
    %v52 = vstv %s51
    %v53 = vmul.f32 %v52, %v26
    %s54 = sld [smem:[#allocation3 + $0xa]]
    %v55 = vstv %s54
    %v56 = vadd.f32 %v53, %v55
    %v57 = vmax.f32 %v56, 0.0
    %s58 = sld [smem:[#allocation3 + $0x12]]
    %v59 = vstv %s58
    %v60 = vmul.f32 %v59, %v57
    %v61 = vadd.f32 %v50, %v60
    %s62 = sld [smem:[#allocation3 + $0x3]]
    %v63 = vstv %s62
    %v64 = vmul.f32 %v63, %v26
    %s65 = sld [smem:[#allocation3 + $0xb]]
    %v66 = vstv %s65
    %v67 = vadd.f32 %v64, %v66
    %v68 = vmax.f32 %v67, 0.0
    %s69 = sld [smem:[#allocation3 + $0x13]]
    %v70 = vstv %s69
    %v71 = vmul.f32 %v70, %v68
    %v72 = vadd.f32 %v61, %v71
    %s73 = sld [smem:[#allocation3 + $0x4]]
    %v74 = vstv %s73
    %v75 = vmul.f32 %v74, %v26
    %s76 = sld [smem:[#allocation3 + $0xc]]
    %v77 = vstv %s76
    %v78 = vadd.f32 %v75, %v77
    %v79 = vmax.f32 %v78, 0.0
    %s80 = sld [smem:[#allocation3 + $0x14]]
    %v81 = vstv %s80
    %v82 = vmul.f32 %v81, %v79
    %v83 = vadd.f32 %v72, %v82
    %s84 = sld [smem:[#allocation3 + $0x5]]
    %v85 = vstv %s84
    %v86 = vmul.f32 %v85, %v26
    %s87 = sld [smem:[#allocation3 + $0xd]]
    %v88 = vstv %s87
    %v89 = vadd.f32 %v86, %v88
    %v90 = vmax.f32 %v89, 0.0
    %s91 = sld [smem:[#allocation3 + $0x15]]
    %v92 = vstv %s91
    %v93 = vmul.f32 %v92, %v90
    %v94 = vadd.f32 %v83, %v93
    %s95 = sld [smem:[#allocation3 + $0x6]]
    %v96 = vstv %s95
    %v97 = vmul.f32 %v96, %v26
    %s98 = sld [smem:[#allocation3 + $0xe]]
    %v99 = vstv %s98
    %v100 = vadd.f32 %v97, %v99
    %v101 = vmax.f32 %v100, 0.0
    %s102 = sld [smem:[#allocation3 + $0x16]]
    %v103 = vstv %s102
    %v104 = vmul.f32 %v103, %v101
    %v105 = vadd.f32 %v94, %v104
    %s106 = sld [smem:[#allocation3 + $0x7]]
    %v107 = vstv %s106
    %v108 = vmul.f32 %v107, %v26
    %s109 = sld [smem:[#allocation3 + $0xf]]
    %v110 = vstv %s109
    %v111 = vadd.f32 %v108, %v110
    %v112 = vmax.f32 %v111, 0.0
    %s113 = sld [smem:[#allocation3 + $0x17]]
    %v114 = vstv %s113
    %v115 = vmul.f32 %v114, %v112
    %v116 = vadd.f32 %v105, %v115
    %v117 = vlaneseq
    %vm118 = vcmp.ge.s32.totalorder %v117, 0
    %vm119 = vcmp.lt.s32.totalorder %v117, 512
    %vm120 = vmand %vm118, %vm119
    %121 = vst.msk [vmem:[#allocation7] sm:$0xf] %vm120, %v116
    // Predicated region
    $region10: #{tpu_custom_call.1} parent=1 // pred_check
      _
    $region11: #{tpu_custom_call.1} parent=1 // pred_check_branch
      %123 = sbr.rel (0) target = $region13
    $region12: #{tpu_custom_call.1} parent=1 // pred_region
      %s125 = ssub.s32 64, 64
      %126 = vsyncadd [#allocation6], %s125
      %s128 = sshll.u32 [#allocation7], 4
      %s129 = int_to_ptr.vmem [resolvable:$true] %s128
      %131 = dma.vmem_to_hbm [thread:$0]  %s129, 64, %s2, [#allocation6]
    $region13: #{tpu_custom_call.1} parent=1 // pred_fallthru
      _
    // Predicated region
    $region14: #{tpu_custom_call.1} parent=1 // pred_check
      _
    $region15: #{tpu_custom_call.1} parent=1 // pred_check_branch
      %133 = sbr.rel (0) target = $region17
    $region16: #{tpu_custom_call.1} parent=1 // pred_region
      %134 = dma.done [#allocation6], 64
    $region17: #{tpu_custom_call.1} parent=1 // pred_fallthru
      _
    %135 = vsyncpa [#allocation5], 1
    %136 = vsyncpa [#allocation6], 1

</llo_original>
